<compile_context>
chip_gen: v5e
topology: v5e:2x2
jax: 0.10.0
libtpu: 0.0.40
codegen_flags: <defaults>
</compile_context>

<pallas_src>
import jax
import jax.numpy as jnp
from jax import lax
from jax.experimental import pallas as pl
from jax.experimental.pallas import tpu as pltpu


# 2048 * 128 * 4 B = 1 MiB per f32 activation block (2 MiB double-buffered),
# plus ~64 KiB of resident weights: comfortably under the 16 MiB scoped VMEM
# default on v5e and the 32 MiB default on v6e/v7x.
_MAX_TB = 2048


def _round_up(x, m):
    return -(-x // m) * m


def _pick_batch_tile(B):
    """Batch tile that keeps blocks legal, weights resident and the grid pipelined.

    - B <= 256: single grid step; blocks equal the full array dims (always legal).
    - B >  256: tile is a multiple of 128 (legal sublane tiling for the x block
      AND lane-dense output block), capped at _MAX_TB, and sized so the grid has
      at least 2 steps (v7x megacore sharding of the "parallel" batch axis).
    """
    if B <= 256:
        return B
    return min(_MAX_TB, _round_up(-(-B // 2), 128))


def _value_kernel(x_ref, w1_ref, b1_ref, w2_ref, b2_ref, o_ref):
    # fc1: x @ W1^T + b1, then ReLU.  W1 stays in PyTorch (out, in) layout;
    # contract the last dims of x and W1 (transposed contraction is free on
    # the MXU, no wrapper transpose).  Accumulate in f32 even if the operands
    # were cast to bf16 by the wrapper.
    h = lax.dot_general(
        x_ref[...], w1_ref[...],
        dimension_numbers=(((1,), (1,)), ((), ())),
        preferred_element_type=jnp.float32,
    )
    h = jnp.maximum(h + b1_ref[...], 0.0)            # (TB, D), f32 epilogue

    # fc2 has a single output unit.  Contract the (1, D) weight row against
    # h's feature axis so the result comes out as a lane-dense (1, TB) row:
    # dense vst + dense HBM writeback instead of masked 1-lane-wide stores.
    v = lax.dot_general(
        w2_ref[...], h,
        dimension_numbers=(((1,), (1,)), ((), ())),
        preferred_element_type=jnp.float32,
    )                                                 # (1, TB)
    v = v + b2_ref[0, 0]                              # scalar bias from SMEM
    o_ref[...] = v.astype(o_ref.dtype)


def value_net_forward(c, w1, b1, w2, b2, *, matmul_dtype=None):
    """ValueNet forward in a single fused Pallas kernel.

    Args:
      c:  (B, D) latent condition.
      w1: (D, D) fc1 weight in PyTorch (out, in) layout (NOT transposed).
      b1: (D,)   fc1 bias.
      w2: (1, D) fc2 weight in PyTorch (out, in) layout (lane-dense row).
      b2: (1,)   fc2 bias.
      matmul_dtype: optional dtype (e.g. jnp.bfloat16) for the fc1 MXU
        operands; halves DMA on v6e/v7x.  Epilogue stays f32.

    Returns:
      (B, 1) predicted value (dtype of c).
    """
    B, D = c.shape
    TB = _pick_batch_tile(B)
    B_pad = _round_up(B, TB)
    grid = (B_pad // TB,)

    x = c
    w1_in = jnp.asarray(w1)
    if matmul_dtype is not None:
        x = x.astype(matmul_dtype)
        w1_in = w1_in.astype(matmul_dtype)
    if B_pad != B:
        # Zero-pad the ragged last tile; padded rows are sliced off below.
        x = jnp.pad(x, ((0, B_pad - B), (0, 0)))

    b1_2d = jnp.asarray(b1, jnp.float32).reshape(1, D)     # lane-dense VMEM row
    w2_2d = jnp.asarray(w2, jnp.float32).reshape(1, D)     # lane-dense VMEM row
    b2_2d = jnp.asarray(b2, jnp.float32).reshape(1, 1)     # scalar -> SMEM

    out = pl.pallas_call(
        _value_kernel,
        out_shape=jax.ShapeDtypeStruct((1, B_pad), c.dtype),
        grid_spec=pltpu.PrefetchScalarGridSpec(
            num_scalar_prefetch=0,
            grid=grid,
            in_specs=[
                pl.BlockSpec((TB, D), lambda i: (i, 0)),    # activations, tiled on batch
                pl.BlockSpec((D, D), lambda i: (0, 0)),     # fc1 weight, VMEM-resident
                pl.BlockSpec((1, D), lambda i: (0, 0)),     # fc1 bias row
                pl.BlockSpec((1, D), lambda i: (0, 0)),     # fc2 weight row
                pl.BlockSpec(memory_space=pltpu.MemorySpace.SMEM),  # fc2 bias scalar
            ],
            # Lane-dense output: batch on the lane axis, one (1, TB) row per step.
            out_specs=pl.BlockSpec((1, TB), lambda i: (0, i)),
        ),
        compiler_params=pltpu.CompilerParams(
            dimension_semantics=("parallel",),
        ),
    )(x, w1_in, b1_2d, w2_2d, b2_2d)

    # Free layout plumbing back to the PyTorch (B, 1) shape.
    return out.reshape(B_pad, 1)[:B]


def reference_value_net(c, w1, b1, w2, b2):
    """Pure-JAX reference matching PyTorch semantics (nn.Linear: x @ W.T + b)."""
    h = jax.nn.relu(c @ w1.T + b1)
    return h @ w2.T + b2


if __name__ == "__main__":
    DIM_CONDITION = 128

    key = jax.random.PRNGKey(0)
    k_c, k_w1, k_b1, k_w2, k_b2, k_c2 = jax.random.split(key, 6)

    scale = 1.0 / jnp.sqrt(DIM_CONDITION)
    # PyTorch nn.Linear parameter shapes:
    #   fc1: weight (D, D), bias (D,);  fc2: weight (1, D), bias (1,)
    w1 = jax.random.uniform(k_w1, (DIM_CONDITION, DIM_CONDITION),
                            minval=-scale, maxval=scale, dtype=jnp.float32)
    b1 = jax.random.uniform(k_b1, (DIM_CONDITION,),
                            minval=-scale, maxval=scale, dtype=jnp.float32)
    w2 = jax.random.uniform(k_w2, (1, DIM_CONDITION),
                            minval=-scale, maxval=scale, dtype=jnp.float32)
    b2 = jax.random.uniform(k_b2, (1,),
                            minval=-scale, maxval=scale, dtype=jnp.float32)

    # ---- Case 1: module's toy shape (B=8), f32 path, bit-accurate check ----
    B = 8
    c = jax.random.normal(k_c, (B, DIM_CONDITION), dtype=jnp.float32)
    value = jax.block_until_ready(value_net_forward(c, w1, b1, w2, b2))
    ref = reference_value_net(c, w1, b1, w2, b2)
    assert value.shape == (B, 1), value.shape
    assert jnp.allclose(value, ref, atol=1e-4, rtol=1e-4), (value, ref)

    # ---- Case 2: ragged batch exercising the padded multi-tile lane-dense path ----
    B2 = 300
    c2 = jax.random.normal(k_c2, (B2, DIM_CONDITION), dtype=jnp.float32)
    value2 = jax.block_until_ready(value_net_forward(c2, w1, b1, w2, b2))
    ref2 = reference_value_net(c2, w1, b1, w2, b2)
    assert value2.shape == (B2, 1), value2.shape
    assert jnp.allclose(value2, ref2, atol=1e-4, rtol=1e-4)

    # ---- Case 3: bf16 MXU operands (v6e/v7x DMA/MXU win), looser tolerance ----
    value_bf16 = jax.block_until_ready(
        value_net_forward(c2, w1, b1, w2, b2, matmul_dtype=jnp.bfloat16))
    assert value_bf16.shape == (B2, 1), value_bf16.shape
    assert jnp.allclose(value_bf16, ref2, atol=5e-2, rtol=5e-2)

    print("KERNEL_OK")
</pallas_src>

<mosaic_0001>
module attributes {stable_mosaic.version = 11 : i64} {
  func.func @_value_kernel(%arg0: i32, %arg1: memref<8x128xf32, #tpu.memory_space<vmem>>, %arg2: memref<128x128xf32, #tpu.memory_space<vmem>>, %arg3: memref<1x128xf32, #tpu.memory_space<vmem>>, %arg4: memref<1x128xf32, #tpu.memory_space<vmem>>, %arg5: memref<1x1xf32, #tpu.memory_space<smem>>, %arg6: memref<1x8xf32, #tpu.memory_space<vmem>>) attributes {dimension_semantics = [#tpu.dimension_semantics<parallel>], iteration_bounds = array<i64: 1>, scalar_prefetch = 0 : i64, scratch_operands = 0 : i64, tpu.core_type = #tpu.core_type<tc>, window_params = [{transform_indices = @transform_0, window_bounds = array<i64: 8, 128>}, {pipeline_mode = #tpu.pipeline_mode<synchronous>, transform_indices = @transform_1, window_bounds = array<i64: 128, 128>}, {pipeline_mode = #tpu.pipeline_mode<synchronous>, transform_indices = @transform_2, window_bounds = array<i64: 1, 128>}, {pipeline_mode = #tpu.pipeline_mode<synchronous>, transform_indices = @transform_3, window_bounds = array<i64: 1, 128>}, {transform_indices = @transform_4, window_bounds = array<i64: 1, 1>}, {transform_indices = @transform_5, window_bounds = array<i64: 1, 8>}]} {
    %c0 = arith.constant 0 : index
    %c0_0 = arith.constant 0 : index
    %0 = vector.load %arg1[%c0, %c0_0] : memref<8x128xf32, #tpu.memory_space<vmem>>, vector<8x128xf32>
    %c0_1 = arith.constant 0 : index
    %c0_2 = arith.constant 0 : index
    %1 = vector.load %arg2[%c0_1, %c0_2] : memref<128x128xf32, #tpu.memory_space<vmem>>, vector<128x128xf32>
    %cst = arith.constant dense<0.000000e+00> : vector<8x128xf32>
    %2 = tpu.matmul %0, %1, %cst {dimension_numbers = #tpu.dot_dimension_numbers<[1], [1], [0], [0], [0, 0, 1, 0], [], []>} : vector<8x128xf32>, vector<128x128xf32>, vector<8x128xf32> -> vector<8x128xf32>
    %c0_3 = arith.constant 0 : index
    %c0_4 = arith.constant 0 : index
    %3 = vector.load %arg3[%c0_3, %c0_4] : memref<1x128xf32, #tpu.memory_space<vmem>>, vector<1x128xf32>
    %4 = vector.broadcast %3 : vector<1x128xf32> to vector<8x128xf32>
    %5 = arith.addf %2, %4 : vector<8x128xf32>
    %cst_5 = arith.constant 0.000000e+00 : f32
    %6 = vector.broadcast %cst_5 : f32 to vector<8x128xf32>
    %7 = arith.maximumf %5, %6 : vector<8x128xf32>
    %c0_6 = arith.constant 0 : index
    %c0_7 = arith.constant 0 : index
    %8 = vector.load %arg4[%c0_6, %c0_7] : memref<1x128xf32, #tpu.memory_space<vmem>>, vector<1x128xf32>
    %cst_8 = arith.constant dense<0.000000e+00> : vector<1x8xf32>
    %9 = tpu.matmul %8, %7, %cst_8 {dimension_numbers = #tpu.dot_dimension_numbers<[1], [1], [0], [0], [0, 0, 1, 0], [], []>} : vector<1x128xf32>, vector<8x128xf32>, vector<1x8xf32> -> vector<1x8xf32>
    %c0_9 = arith.constant 0 : index
    %c0_10 = arith.constant 0 : index
    %10 = memref.load %arg5[%c0_9, %c0_10] : memref<1x1xf32, #tpu.memory_space<smem>>
    %11 = vector.broadcast %10 : f32 to vector<1x8xf32>
    %12 = arith.addf %9, %11 : vector<1x8xf32>
    %c0_11 = arith.constant 0 : index
    %c0_12 = arith.constant 0 : index
    %13 = vector.load %arg6[%c0_11, %c0_12] : memref<1x8xf32, #tpu.memory_space<vmem>>, vector<1x8xf32>
    tpu.vector_store %arg6[%c0_11, %c0_12], %12 {strides = array<i32>} : memref<1x8xf32, #tpu.memory_space<vmem>>, vector<1x8xf32>,
    return
  }
  func.func @transform_0(%arg0: i32) -> (i32, i32) {
    %c0_i32 = arith.constant 0 : i32
    %c0_i32_0 = arith.constant 0 : i32
    return %arg0, %c0_i32 : i32, i32
  }
  func.func @transform_1(%arg0: i32) -> (i32, i32) {
    %c0_i32 = arith.constant 0 : i32
    %c0_i32_0 = arith.constant 0 : i32
    %c0_i32_1 = arith.constant 0 : i32
    return %c0_i32, %c0_i32_0 : i32, i32
  }
  func.func @transform_2(%arg0: i32) -> (i32, i32) {
    %c0_i32 = arith.constant 0 : i32
    %c0_i32_0 = arith.constant 0 : i32
    %c0_i32_1 = arith.constant 0 : i32
    return %c0_i32, %c0_i32_0 : i32, i32
  }
  func.func @transform_3(%arg0: i32) -> (i32, i32) {
    %c0_i32 = arith.constant 0 : i32
    %c0_i32_0 = arith.constant 0 : i32
    %c0_i32_1 = arith.constant 0 : i32
    return %c0_i32, %c0_i32_0 : i32, i32
  }
  func.func @transform_4(%arg0: i32) -> (i32, i32) {
    %c0_i32 = arith.constant 0 : i32
    %c0_i32_0 = arith.constant 0 : i32
    %c0_i32_1 = arith.constant 0 : i32
    return %c0_i32, %c0_i32_0 : i32, i32
  }
  func.func @transform_5(%arg0: i32) -> (i32, i32) {
    %c0_i32 = arith.constant 0 : i32
    %c0_i32_0 = arith.constant 0 : i32
    return %c0_i32, %arg0 : i32, i32
  }
}

</mosaic_0001>

<llo_original>
// kernel: tpu_custom_call.1
$region0: #{tpu_custom_call.1}
  #allocation0 [shape = 'u32[]', space=smem, size = 0x4, offset = 0x4, fixed_abs, tag = 'smem constant byte address 0x4 - core index']
  #allocation1 [shape = 'u32[72,128]{1,0:T(1,128)}', space=vmem, size = 0x9000, scoped, tag = 'internal scratch']
  #allocation2 [shape = 'f32[1,1]{1,0:T(1,128)S(6)}', space=smem, size = 0x200, scoped, tag = 'scoped memory for tpu_custom_call.1']
  %s0 = inlined_call_operand.hbm [shape: f32[8,128], index: 0, kind: input, shape index: {}]
  %s1 = inlined_call_operand.hbm [shape: f32[128,128], index: 1, kind: input, shape index: {}]
  %s2 = inlined_call_operand.vmem [shape: f32[1,128], index: 2, kind: input, shape index: {}]
  %s3 = inlined_call_operand.vmem [shape: f32[1,128], index: 3, kind: input, shape index: {}]
  %s4 = inlined_call_operand.<no memory space> [shape: f32[1,1], index: 4, kind: input, shape index: {}]
  %s5 = inlined_call_operand.hbm [shape: f32[1,8], index: 5, kind: output, shape index: {}]
  %s6 = sld [smem:[#allocation0]]
  $region38: #{tpu_custom_call.1} parent=0
    _
  %s8 = ssub.s32 1, %s6
  %s9 = scalar_select 0, %s8, %s6
  %10 = sst [smem:[#allocation2]] %s4
  $region1: #{tpu_custom_call.1} parent=0
    #allocation3 [shape = 'u8[4096]{0}', space=vmem, size = 0x1000, scoped, tag = 'input window, operand 0, single buffered']
    #allocation4 [shape = 's32[1]{0}', space=sflag, size = 0x4, scoped, tag = 'scoped memory for tpu_custom_call.1']
    #allocation5 [shape = 's32[1]{0}', space=sflag, size = 0x4, scoped, tag = 'scoped memory for tpu_custom_call.1']
    #allocation6 [shape = 'u8[65536]{0}', space=vmem, size = 0x10000, scoped, tag = 'input window, operand 1, single buffered']
    #allocation7 [shape = 's32[1]{0}', space=sflag, size = 0x4, scoped, tag = 'scoped memory for tpu_custom_call.1']
    #allocation8 [shape = 'u8[512]{0}', space=vmem, size = 0x400, scoped, tag = 'output window, operand 0, single buffered']
    %11 = vsyncpa [#allocation4], 0
    %12 = vsyncpa [#allocation7], 0
    %13 = vsyncpa [#allocation5], 0
    // Predicated region
    $region2: #{tpu_custom_call.1} parent=1 // pred_check
      _
    $region3: #{tpu_custom_call.1} parent=1 // pred_check_branch
      %15 = sbr.rel (0) target = $region5
    $region4: #{tpu_custom_call.1} parent=1 // pred_region
      %17 = vsyncadd [#allocation4], 0
      %s19 = sshll.u32 %s0, 4
      %s20 = int_to_ptr.hbm [resolvable:$true] %s19
      %s21 = sshll.u32 [#allocation3], 4
      %s22 = int_to_ptr.vmem [resolvable:$true] %s21
      %24 = dma.hbm_to_vmem [thread:$0]  %s20, 128, %s22, [#allocation4]
    $region5: #{tpu_custom_call.1} parent=1 // pred_fallthru
      _
    // Predicated region
    $region6: #{tpu_custom_call.1} parent=1 // pred_check
      _
    $region7: #{tpu_custom_call.1} parent=1 // pred_check_branch
      %26 = sbr.rel (0) target = $region9
    $region8: #{tpu_custom_call.1} parent=1 // pred_region
      %28 = vsyncadd [#allocation7], 0
      %s29 = sshll.u32 %s1, 4
      %s30 = int_to_ptr.hbm [resolvable:$true] %s29
      %s31 = sshll.u32 [#allocation6], 4
      %s32 = int_to_ptr.vmem [resolvable:$true] %s31
      %37 = dma.hbm_to_vmem [thread:$0]  %s30, 2048, %s32, [#allocation7], 128, 128, 8
    $region9: #{tpu_custom_call.1} parent=1 // pred_fallthru
      _
    // Predicated region
    $region10: #{tpu_custom_call.1} parent=1 // pred_check
      _
    $region11: #{tpu_custom_call.1} parent=1 // pred_check_branch
      %39 = sbr.rel (0) target = $region13
    $region12: #{tpu_custom_call.1} parent=1 // pred_region
      _
    $region13: #{tpu_custom_call.1} parent=1 // pred_fallthru
      _
    // Predicated region
    $region14: #{tpu_custom_call.1} parent=1 // pred_check
      _
    $region15: #{tpu_custom_call.1} parent=1 // pred_check_branch
      %41 = sbr.rel (0) target = $region17
    $region16: #{tpu_custom_call.1} parent=1 // pred_region
      _
    $region17: #{tpu_custom_call.1} parent=1 // pred_fallthru
      _
    // Predicated region
    $region18: #{tpu_custom_call.1} parent=1 // pred_check
      _
    $region19: #{tpu_custom_call.1} parent=1 // pred_check_branch
      %43 = sbr.rel (0) target = $region21
    $region20: #{tpu_custom_call.1} parent=1 // pred_region
      _
    $region21: #{tpu_custom_call.1} parent=1 // pred_fallthru
      _
    // Predicated region
    $region22: #{tpu_custom_call.1} parent=1 // pred_check
      _
    $region23: #{tpu_custom_call.1} parent=1 // pred_check_branch
      %45 = sbr.rel (0) target = $region25
    $region24: #{tpu_custom_call.1} parent=1 // pred_region
      %47 = dma.done [#allocation4], 128
    $region25: #{tpu_custom_call.1} parent=1 // pred_fallthru
      _
    // Predicated region
    $region26: #{tpu_custom_call.1} parent=1 // pred_check
      _
    $region27: #{tpu_custom_call.1} parent=1 // pred_check_branch
      %49 = sbr.rel (0) target = $region29
    $region28: #{tpu_custom_call.1} parent=1 // pred_region
      %51 = dma.done [#allocation7], 2048
    $region29: #{tpu_custom_call.1} parent=1 // pred_fallthru
      _
    %v52 = vld [vmem:[#allocation3] sm:$0xff]
    %v53 = vld [vmem:[#allocation6] sm:$0xff]
    %v54 = vld [vmem:[#allocation6 + $0x8] sm:$0xff]
    %v55 = vld [vmem:[#allocation6 + $0x10] sm:$0xff]
    %v56 = vld [vmem:[#allocation6 + $0x18] sm:$0xff]
    %v57 = vld [vmem:[#allocation6 + $0x20] sm:$0xff]
    %v58 = vld [vmem:[#allocation6 + $0x28] sm:$0xff]
    %v59 = vld [vmem:[#allocation6 + $0x30] sm:$0xff]
    %v60 = vld [vmem:[#allocation6 + $0x38] sm:$0xff]
    %v61 = vld [vmem:[#allocation6 + $0x40] sm:$0xff]
    %v62 = vld [vmem:[#allocation6 + $0x48] sm:$0xff]
    %v63 = vld [vmem:[#allocation6 + $0x50] sm:$0xff]
    %v64 = vld [vmem:[#allocation6 + $0x58] sm:$0xff]
    %v65 = vld [vmem:[#allocation6 + $0x60] sm:$0xff]
    %v66 = vld [vmem:[#allocation6 + $0x68] sm:$0xff]
    %v67 = vld [vmem:[#allocation6 + $0x70] sm:$0xff]
    %v68 = vld [vmem:[#allocation6 + $0x78] sm:$0xff]
    %v69 = vld [vmem:[%s2] sm:$0x1]
    %v71 = vperm.slane %v69, 0
    %73 = vmatpush.xpose.msra.mxu0 %v68
    %74 = vmatpush.xpose.msra.mxu0 %v67
    %75 = vmatpush.xpose.msra.mxu0 %v66
    %76 = vmatpush.xpose.msra.mxu0 %v65
    %77 = vmatpush.xpose.msra.mxu0 %v64
    %78 = vmatpush.xpose.msra.mxu0 %v63
    %79 = vmatpush.xpose.msra.mxu0 %v62
    %80 = vmatpush.xpose.msra.mxu0 %v61
    %81 = vmatpush.xpose.msra.mxu0 %v60
    %82 = vmatpush.xpose.msra.mxu0 %v59
    %83 = vmatpush.xpose.msra.mxu0 %v58
    %84 = vmatpush.xpose.msra.mxu0 %v57
    %85 = vmatpush.xpose.msra.mxu0 %v56
    %86 = vmatpush.xpose.msra.mxu0 %v55
    %87 = vmatpush.xpose.msra.mxu0 %v54
    %88 = vmatpush.xpose.msra.mxu0 %v53
    %89 = vmatmul.f32.gmra.mxu0 %v52
    %v90 = vpop.f32.mrf.mxu0
    %v91 = vadd.f32 %v71, %v90
    %92 = vdwg.mxu0
    %v93 = vmax.f32 %v91, 0.0
    %v94 = vld [vmem:[%s3] sm:$0x1]
    %s95 = sld [smem:[#allocation2]]
    %v96 = vstv %s95
    %97 = vmatpush.xpose.msra.mxu0 0.0
    %98 = vmatpush.xpose.msra.mxu0 0.0
    %99 = vmatpush.xpose.msra.mxu0 0.0
    %100 = vmatpush.xpose.msra.mxu0 0.0
    %101 = vmatpush.xpose.msra.mxu0 0.0
    %102 = vmatpush.xpose.msra.mxu0 0.0
    %103 = vmatpush.xpose.msra.mxu0 0.0
    %104 = vmatpush.xpose.msra.mxu0 0.0
    %105 = vmatpush.xpose.msra.mxu0 0.0
    %106 = vmatpush.xpose.msra.mxu0 0.0
    %107 = vmatpush.xpose.msra.mxu0 0.0
    %108 = vmatpush.xpose.msra.mxu0 0.0
    %109 = vmatpush.xpose.msra.mxu0 0.0
    %110 = vmatpush.xpose.msra.mxu0 0.0
    %111 = vmatpush.xpose.msra.mxu0 0.0
    %112 = vmatpush.xpose.msra.mxu0 %v93
    %113 = vmatmul.f32.gmra.mxu0 %v94
    %v114 = vpop.f32.mrf.mxu0
    %v115 = vadd.f32 %v96, %v114
    %116 = vdwg.mxu0
    %vm117 = vcmask 57344
    %118 = vst.msk [vmem:[#allocation8] sm:$0x1] %vm117, %v115
    // Predicated region
    $region30: #{tpu_custom_call.1} parent=1 // pred_check
      _
    $region31: #{tpu_custom_call.1} parent=1 // pred_check_branch
      %120 = sbr.rel (0) target = $region33
    $region32: #{tpu_custom_call.1} parent=1 // pred_region
      %122 = vsyncadd [#allocation5], 0
      %s124 = sshll.u32 [#allocation8], 4
      %s125 = int_to_ptr.vmem [resolvable:$true] %s124
      %s126 = sshll.u32 %s5, 4
      %s127 = int_to_ptr.hbm [resolvable:$true] %s126
      %129 = dma.vmem_to_hbm [thread:$0]  %s125, 16, %s127, [#allocation5]
    $region33: #{tpu_custom_call.1} parent=1 // pred_fallthru
      _
    // Predicated region
    $region34: #{tpu_custom_call.1} parent=1 // pred_check
      _
    $region35: #{tpu_custom_call.1} parent=1 // pred_check_branch
      %131 = sbr.rel (0) target = $region37
    $region36: #{tpu_custom_call.1} parent=1 // pred_region
      %133 = dma.done [#allocation5], 16
    $region37: #{tpu_custom_call.1} parent=1 // pred_fallthru
      _
    %134 = vsyncpa [#allocation4], 1
    %135 = vsyncpa [#allocation7], 1
    %136 = vsyncpa [#allocation5], 1

</llo_original>
